<compile_context>
chip_gen: v5e
topology: v5e:2x2
jax: 0.10.0
libtpu: 0.0.40
codegen_flags: <defaults>
</compile_context>

<pallas_src>
import functools

import jax
import jax.numpy as jnp
from jax.experimental import pallas as pl
from jax.experimental.pallas import tpu as pltpu


def _round_up(v, m):
    return ((v + m - 1) // m) * m


def _mlp_kernel(x_ref, w1_ref, b1_ref, w2_ref, b2_ref, w34_ref, b34_ref, outT_ref):
    cdt = w1_ref.dtype                       # MXU input dtype (f32 or bf16)
    x = x_ref[...].astype(cdt)               # (TM, K): natural layout, cast in-kernel

    # fc1 + relu:  h1^T = relu(W1 @ x^T + b1).  NT dot_general contracts the K
    # axis of both operands; result (H, TM) is lane-dense (batch on lanes).
    h = jax.lax.dot_general(w1_ref[...], x, (((1,), (1,)), ((), ())),
                            preferred_element_type=jnp.float32)
    h = jnp.maximum(h + b1_ref[...], 0.0)

    # fc2 + relu:  (H, H) @ (H, TM) -> (H, TM), f32 accumulation.
    h = jnp.dot(w2_ref[...], h.astype(cdt), preferred_element_type=jnp.float32)
    h = jnp.maximum(h + b2_ref[...], 0.0)

    # fused fc3|fc4 head:  (24, H) @ (H, TM) -> (24, TM), lane-dense store.
    out = jnp.dot(w34_ref[...], h.astype(cdt), preferred_element_type=jnp.float32)
    outT_ref[...] = (out + b34_ref[...]).astype(outT_ref.dtype)


def _prep_params(params, use_bf16):
    """Fuse the two heads, column-ise biases, and (optionally) cast weights.
    All arrays here are tiny (<= (32,32)); this is negligible one-off work."""
    w1, b1, w2, b2, w3, b3, w4, b4 = params
    w34 = jnp.concatenate([w3, w4], axis=0)               # (24, H): rows 0..15 = A head
    b34 = jnp.concatenate([b3, b4], axis=0)[:, None]      # (24, 1)
    mxu_dtype = jnp.bfloat16 if use_bf16 else jnp.float32
    w1c, w2c, w34c = (w.astype(mxu_dtype) for w in (w1, w2, w34))
    return w1c, b1[:, None], w2c, b2[:, None], w34c, b34  # biases stay f32


def _mlp_lane_major(x, params, *, tm, use_bf16, out_dtype):
    """Core pallas_call.  Returns out^T of shape (24, batch): rows 0..15 are the
    fc3 (A) outputs, rows 16..23 are the fc4 (B) outputs, batch on the lane axis."""
    w1, b1, w2, b2, w34, b34 = _prep_params(params, use_bf16)
    batch, k = x.shape
    n_out = w34.shape[0]                                   # 24 = 16 + 8

    # Batch tile: 128-aligned.  Cap it so the grid has >=2 tiles whenever the
    # batch allows -> both v7x TensorCores get work under ("parallel",).
    tm = max(128, (tm // 128) * 128)
    half = max(128, _round_up((batch + 1) // 2, 128))
    tm_eff = min(tm, half)
    grid = (pl.cdiv(batch, tm_eff),)                       # ragged last tile is masked

    resident = lambda a: pl.BlockSpec(a.shape, lambda i: (0,) * a.ndim)

    return pl.pallas_call(
        _mlp_kernel,
        out_shape=jax.ShapeDtypeStruct((n_out, batch), out_dtype),
        grid=grid,
        in_specs=[
            pl.BlockSpec((tm_eff, k), lambda i: (i, 0)),   # x tile, natural layout
            resident(w1), resident(b1),
            resident(w2), resident(b2),
            resident(w34), resident(b34),
        ],
        out_specs=pl.BlockSpec((n_out, tm_eff), lambda i: (0, i)),  # lane-dense out
        compiler_params=pltpu.CompilerParams(
            dimension_semantics=("parallel",),
            # Large tiles: x block lane-pads to (TM,128) in VMEM; keep headroom
            # (still well under v7x's 64 MiB physical VMEM).
            vmem_limit_bytes=40 * 1024 * 1024,
        ),
        # NOTE: if DMA latency is still exposed at moderate TM on a bundle dump,
        # consider pipeline_mode=pl.Buffered(3) on the x / out specs.
    )(x, w1, b1, w2, b2, w34, b34)


@functools.partial(jax.jit, static_argnames=("tm", "use_bf16", "out_dtype"))
def mlp_forward_lane_major(x, params, *, tm=8192, use_bf16=False,
                           out_dtype=jnp.float32):
    """Recommended API: returns the raw lane-major (24, batch) result with no
    extra HBM transpose pass.  Downstream consumers that can work with
    A^T/B^T-per-column should use this directly."""
    return _mlp_lane_major(x, params, tm=tm, use_bf16=use_bf16, out_dtype=out_dtype)


@functools.partial(jax.jit, static_argnames=("tm", "use_bf16", "out_dtype"))
def mlp_forward(x, params, *, tm=8192, use_bf16=False, out_dtype=jnp.float32):
    """Drop-in module semantics: (A, B) with shapes (batch, 4, 4), (batch, 4, 2).
    The final transpose/reshape is pure layout plumbing outside the kernel."""
    outT = _mlp_lane_major(x, params, tm=tm, use_bf16=use_bf16, out_dtype=out_dtype)
    out = outT.T                                            # (batch, 24)
    A = out[:, :16].reshape(-1, 4, 4)
    B = out[:, 16:].reshape(-1, 4, 2)
    return A, B


def init_params(key, input_size, hidden_size):
    """Deterministic init mimicking nn.Linear: weights (out, in), biases (out,)."""
    ks = jax.random.split(key, 8)

    def linear(kw, kb, fan_in, fan_out):
        bound = 1.0 / jnp.sqrt(fan_in)
        w = jax.random.uniform(kw, (fan_out, fan_in), jnp.float32, -bound, bound)
        b = jax.random.uniform(kb, (fan_out,), jnp.float32, -bound, bound)
        return w, b

    w1, b1 = linear(ks[0], ks[1], input_size, hidden_size)
    w2, b2 = linear(ks[2], ks[3], hidden_size, hidden_size)
    w3, b3 = linear(ks[4], ks[5], hidden_size, 16)   # fc3: hidden -> 4*4
    w4, b4 = linear(ks[6], ks[7], hidden_size, 8)    # fc4: hidden -> 4*2
    return (w1, b1, w2, b2, w3, b3, w4, b4)


def mlp_reference(x, params):
    """Plain-JAX reference (same math as the PyTorch module)."""
    w1, b1, w2, b2, w3, b3, w4, b4 = params
    with jax.default_matmul_precision("highest"):
        h = jnp.maximum(x @ w1.T + b1, 0.0)
        h = jnp.maximum(h @ w2.T + b2, 0.0)
        A = (h @ w3.T + b3).reshape(-1, 4, 4)
        B = (h @ w4.T + b4).reshape(-1, 4, 2)
    return A, B


if __name__ == "__main__":
    key = jax.random.PRNGKey(0)
    batch, input_size, hidden_size = 8, 6, 32   # state(4)+control(2) -> hidden 32

    kx, kp = jax.random.split(key)
    x = jax.random.normal(kx, (batch, input_size), jnp.float32)
    params = init_params(kp, input_size, hidden_size)

    A_ref, B_ref = mlp_reference(x, params)

    # f32 path, tiny batch -> a single 128-lane tile (grid=(1,)).
    A, B = mlp_forward(x, params)
    jax.block_until_ready((A, B))
    assert A.shape == (batch, 4, 4) and B.shape == (batch, 4, 2)
    assert jnp.allclose(A, A_ref, atol=1e-4, rtol=1e-4)
    assert jnp.allclose(B, B_ref, atol=1e-4, rtol=1e-4)

    # Multi-tile + ragged-last-block path: batch=300 -> tm_eff=256, grid=(2,),
    # the second block is masked on write (no wrapper pad / slice needed).
    batch2 = 300
    x2 = jax.random.normal(jax.random.PRNGKey(1), (batch2, input_size), jnp.float32)
    A2_ref, B2_ref = mlp_reference(x2, params)
    A2, B2 = mlp_forward(x2, params)
    jax.block_until_ready((A2, B2))
    assert A2.shape == (batch2, 4, 4) and B2.shape == (batch2, 4, 2)
    assert jnp.allclose(A2, A2_ref, atol=1e-4, rtol=1e-4)
    assert jnp.allclose(B2, B2_ref, atol=1e-4, rtol=1e-4)

    # Lane-major API (no output transpose pass) + bf16 MXU inputs + bf16 output:
    # the minimum-HBM-traffic configuration.  Looser tolerance (bf16 end to end).
    outT = mlp_forward_lane_major(x2, params, use_bf16=True, out_dtype=jnp.bfloat16)
    jax.block_until_ready(outT)
    assert outT.shape == (24, batch2)
    out_ref = jnp.concatenate(
        [A2_ref.reshape(batch2, 16), B2_ref.reshape(batch2, 8)], axis=1).T
    assert jnp.allclose(outT.astype(jnp.float32), out_ref, atol=5e-2, rtol=5e-2)

    print("KERNEL_OK")
</pallas_src>

<mosaic_0001>
module attributes {stable_mosaic.version = 11 : i64} {
  func.func @_mlp_kernel(%arg0: i32, %arg1: memref<128x6xf32, #tpu.memory_space<vmem>>, %arg2: memref<32x6xf32, #tpu.memory_space<vmem>>, %arg3: memref<32x1xf32, #tpu.memory_space<vmem>>, %arg4: memref<32x32xf32, #tpu.memory_space<vmem>>, %arg5: memref<32x1xf32, #tpu.memory_space<vmem>>, %arg6: memref<24x32xf32, #tpu.memory_space<vmem>>, %arg7: memref<24x1xf32, #tpu.memory_space<vmem>>, %arg8: memref<24x128xf32, #tpu.memory_space<vmem>>) attributes {dimension_semantics = [#tpu.dimension_semantics<parallel>], iteration_bounds = array<i64: 1>, scalar_prefetch = 0 : i64, scratch_operands = 0 : i64, tpu.core_type = #tpu.core_type<tc>, window_params = [{transform_indices = @transform_0, window_bounds = array<i64: 128, 6>}, {pipeline_mode = #tpu.pipeline_mode<synchronous>, transform_indices = @transform_1, window_bounds = array<i64: 32, 6>}, {pipeline_mode = #tpu.pipeline_mode<synchronous>, transform_indices = @transform_2, window_bounds = array<i64: 32, 1>}, {pipeline_mode = #tpu.pipeline_mode<synchronous>, transform_indices = @transform_3, window_bounds = array<i64: 32, 32>}, {pipeline_mode = #tpu.pipeline_mode<synchronous>, transform_indices = @transform_4, window_bounds = array<i64: 32, 1>}, {pipeline_mode = #tpu.pipeline_mode<synchronous>, transform_indices = @transform_5, window_bounds = array<i64: 24, 32>}, {pipeline_mode = #tpu.pipeline_mode<synchronous>, transform_indices = @transform_6, window_bounds = array<i64: 24, 1>}, {transform_indices = @transform_7, window_bounds = array<i64: 24, 128>}]} {
    %c0 = arith.constant 0 : index
    %c0_0 = arith.constant 0 : index
    %0 = vector.load %arg1[%c0, %c0_0] : memref<128x6xf32, #tpu.memory_space<vmem>>, vector<128x6xf32>
    %c0_1 = arith.constant 0 : index
    %c0_2 = arith.constant 0 : index
    %1 = vector.load %arg2[%c0_1, %c0_2] : memref<32x6xf32, #tpu.memory_space<vmem>>, vector<32x6xf32>
    %cst = arith.constant dense<0.000000e+00> : vector<32x128xf32>
    %2 = tpu.matmul %1, %0, %cst {dimension_numbers = #tpu.dot_dimension_numbers<[1], [1], [0], [0], [0, 0, 1, 0], [], []>} : vector<32x6xf32>, vector<128x6xf32>, vector<32x128xf32> -> vector<32x128xf32>
    %c0_3 = arith.constant 0 : index
    %c0_4 = arith.constant 0 : index
    %3 = vector.load %arg3[%c0_3, %c0_4] : memref<32x1xf32, #tpu.memory_space<vmem>>, vector<32x1xf32>
    %4 = vector.broadcast %3 : vector<32x1xf32> to vector<32x128xf32>
    %5 = arith.addf %2, %4 : vector<32x128xf32>
    %cst_5 = arith.constant 0.000000e+00 : f32
    %6 = vector.broadcast %cst_5 : f32 to vector<32x128xf32>
    %7 = arith.maximumf %5, %6 : vector<32x128xf32>
    %c0_6 = arith.constant 0 : index
    %c0_7 = arith.constant 0 : index
    %8 = vector.load %arg4[%c0_6, %c0_7] : memref<32x32xf32, #tpu.memory_space<vmem>>, vector<32x32xf32>
    %cst_8 = arith.constant dense<0.000000e+00> : vector<32x128xf32>
    %9 = tpu.matmul %8, %7, %cst_8 {dimension_numbers = #tpu.dot_dimension_numbers<[1], [0], [0], [1], [0, 0, 1, 1], [], []>} : vector<32x32xf32>, vector<32x128xf32>, vector<32x128xf32> -> vector<32x128xf32>
    %c0_9 = arith.constant 0 : index
    %c0_10 = arith.constant 0 : index
    %10 = vector.load %arg5[%c0_9, %c0_10] : memref<32x1xf32, #tpu.memory_space<vmem>>, vector<32x1xf32>
    %11 = vector.broadcast %10 : vector<32x1xf32> to vector<32x128xf32>
    %12 = arith.addf %9, %11 : vector<32x128xf32>
    %cst_11 = arith.constant 0.000000e+00 : f32
    %13 = vector.broadcast %cst_11 : f32 to vector<32x128xf32>
    %14 = arith.maximumf %12, %13 : vector<32x128xf32>
    %c0_12 = arith.constant 0 : index
    %c0_13 = arith.constant 0 : index
    %15 = vector.load %arg6[%c0_12, %c0_13] : memref<24x32xf32, #tpu.memory_space<vmem>>, vector<24x32xf32>
    %cst_14 = arith.constant dense<0.000000e+00> : vector<24x128xf32>
    %16 = tpu.matmul %15, %14, %cst_14 {dimension_numbers = #tpu.dot_dimension_numbers<[1], [0], [0], [1], [0, 0, 1, 1], [], []>} : vector<24x32xf32>, vector<32x128xf32>, vector<24x128xf32> -> vector<24x128xf32>
    %c0_15 = arith.constant 0 : index
    %c0_16 = arith.constant 0 : index
    %17 = vector.load %arg7[%c0_15, %c0_16] : memref<24x1xf32, #tpu.memory_space<vmem>>, vector<24x1xf32>
    %18 = vector.broadcast %17 : vector<24x1xf32> to vector<24x128xf32>
    %19 = arith.addf %16, %18 : vector<24x128xf32>
    %c0_17 = arith.constant 0 : index
    %c0_18 = arith.constant 0 : index
    %20 = vector.load %arg8[%c0_17, %c0_18] : memref<24x128xf32, #tpu.memory_space<vmem>>, vector<24x128xf32>
    tpu.vector_store %arg8[%c0_17, %c0_18], %19 {strides = array<i32>} : memref<24x128xf32, #tpu.memory_space<vmem>>, vector<24x128xf32>,
    return
  }
  func.func @transform_0(%arg0: i32) -> (i32, i32) {
    %c0_i32 = arith.constant 0 : i32
    %c0_i32_0 = arith.constant 0 : i32
    return %arg0, %c0_i32 : i32, i32
  }
  func.func @transform_1(%arg0: i32) -> (i32, i32) {
    %c0_i32 = arith.constant 0 : i32
    %c0_i32_0 = arith.constant 0 : i32
    %c0_i32_1 = arith.constant 0 : i32
    return %c0_i32, %c0_i32_0 : i32, i32
  }
  func.func @transform_2(%arg0: i32) -> (i32, i32) {
    %c0_i32 = arith.constant 0 : i32
    %c0_i32_0 = arith.constant 0 : i32
    %c0_i32_1 = arith.constant 0 : i32
    return %c0_i32, %c0_i32_0 : i32, i32
  }
  func.func @transform_3(%arg0: i32) -> (i32, i32) {
    %c0_i32 = arith.constant 0 : i32
    %c0_i32_0 = arith.constant 0 : i32
    %c0_i32_1 = arith.constant 0 : i32
    return %c0_i32, %c0_i32_0 : i32, i32
  }
  func.func @transform_4(%arg0: i32) -> (i32, i32) {
    %c0_i32 = arith.constant 0 : i32
    %c0_i32_0 = arith.constant 0 : i32
    %c0_i32_1 = arith.constant 0 : i32
    return %c0_i32, %c0_i32_0 : i32, i32
  }
  func.func @transform_5(%arg0: i32) -> (i32, i32) {
    %c0_i32 = arith.constant 0 : i32
    %c0_i32_0 = arith.constant 0 : i32
    %c0_i32_1 = arith.constant 0 : i32
    return %c0_i32, %c0_i32_0 : i32, i32
  }
  func.func @transform_6(%arg0: i32) -> (i32, i32) {
    %c0_i32 = arith.constant 0 : i32
    %c0_i32_0 = arith.constant 0 : i32
    %c0_i32_1 = arith.constant 0 : i32
    return %c0_i32, %c0_i32_0 : i32, i32
  }
  func.func @transform_7(%arg0: i32) -> (i32, i32) {
    %c0_i32 = arith.constant 0 : i32
    %c0_i32_0 = arith.constant 0 : i32
    return %c0_i32, %arg0 : i32, i32
  }
}

</mosaic_0001>

<llo_original>
// kernel: mlp_forward.1
$region0: #{mlp_forward.1}
  #allocation0 [shape = 'u32[]', space=smem, size = 0x4, offset = 0x4, fixed_abs, tag = 'smem constant byte address 0x4 - core index']
  #allocation1 [shape = 'u32[72,128]{1,0:T(1,128)}', space=vmem, size = 0x9000, scoped, tag = 'internal scratch']
  %s0 = inlined_call_operand.vmem [shape: f32[8,6], index: 0, kind: input, shape index: {}]
  %s1 = inlined_call_operand.vmem [shape: f32[32,6], index: 1, kind: input, shape index: {}]
  %s2 = inlined_call_operand.vmem [shape: f32[32,1], index: 2, kind: input, shape index: {}]
  %s3 = inlined_call_operand.vmem [shape: f32[32,32], index: 3, kind: input, shape index: {}]
  %s4 = inlined_call_operand.vmem [shape: f32[32,1], index: 4, kind: input, shape index: {}]
  %s5 = inlined_call_operand.vmem [shape: f32[24,32], index: 5, kind: input, shape index: {}]
  %s6 = inlined_call_operand.vmem [shape: f32[24,1], index: 6, kind: input, shape index: {}]
  %s7 = inlined_call_operand.vmem [shape: f32[24,8], index: 7, kind: output, shape index: {}]
  %s8 = sld [smem:[#allocation0]]
  $region38: #{mlp_forward.1} parent=0
    _
  %s10 = ssub.s32 1, %s8
  %s11 = scalar_select 0, %s10, %s8
  // Predicated region
  $region2: #{mlp_forward.1} parent=0 // pred_check
    _
  $region3: #{mlp_forward.1} parent=0 // pred_check_branch
    %13 = sbr.rel (0) target = $region5
  $region4: #{mlp_forward.1} parent=0 // pred_region
    _
  $region5: #{mlp_forward.1} parent=0 // pred_fallthru
    _
  // Predicated region
  $region6: #{mlp_forward.1} parent=0 // pred_check
    _
  $region7: #{mlp_forward.1} parent=0 // pred_check_branch
    %15 = sbr.rel (0) target = $region9
  $region8: #{mlp_forward.1} parent=0 // pred_region
    _
  $region9: #{mlp_forward.1} parent=0 // pred_fallthru
    _
  // Predicated region
  $region10: #{mlp_forward.1} parent=0 // pred_check
    _
  $region11: #{mlp_forward.1} parent=0 // pred_check_branch
    %17 = sbr.rel (0) target = $region13
  $region12: #{mlp_forward.1} parent=0 // pred_region
    _
  $region13: #{mlp_forward.1} parent=0 // pred_fallthru
    _
  // Predicated region
  $region14: #{mlp_forward.1} parent=0 // pred_check
    _
  $region15: #{mlp_forward.1} parent=0 // pred_check_branch
    %19 = sbr.rel (0) target = $region17
  $region16: #{mlp_forward.1} parent=0 // pred_region
    _
  $region17: #{mlp_forward.1} parent=0 // pred_fallthru
    _
  // Predicated region
  $region18: #{mlp_forward.1} parent=0 // pred_check
    _
  $region19: #{mlp_forward.1} parent=0 // pred_check_branch
    %21 = sbr.rel (0) target = $region21
  $region20: #{mlp_forward.1} parent=0 // pred_region
    _
  $region21: #{mlp_forward.1} parent=0 // pred_fallthru
    _
  // Predicated region
  $region22: #{mlp_forward.1} parent=0 // pred_check
    _
  $region23: #{mlp_forward.1} parent=0 // pred_check_branch
    %23 = sbr.rel (0) target = $region25
  $region24: #{mlp_forward.1} parent=0 // pred_region
    _
  $region25: #{mlp_forward.1} parent=0 // pred_fallthru
    _
  // Predicated region
  $region26: #{mlp_forward.1} parent=0 // pred_check
    _
  $region27: #{mlp_forward.1} parent=0 // pred_check_branch
    %25 = sbr.rel (0) target = $region29
  $region28: #{mlp_forward.1} parent=0 // pred_region
    _
  $region29: #{mlp_forward.1} parent=0 // pred_fallthru
    _
  %v26 = vld [vmem:[%s0] sm:$0xff]
  %v27 = vld [vmem:[%s0 + $0x8] sm:$0xff]
  %v28 = vld [vmem:[%s0 + $0x10] sm:$0xff]
  %v29 = vld [vmem:[%s0 + $0x18] sm:$0xff]
  %v30 = vld [vmem:[%s0 + $0x20] sm:$0xff]
  %v31 = vld [vmem:[%s0 + $0x28] sm:$0xff]
  %v32 = vld [vmem:[%s0 + $0x30] sm:$0xff]
  %v33 = vld [vmem:[%s0 + $0x38] sm:$0xff]
  %v34 = vld [vmem:[%s0 + $0x40] sm:$0xff]
  %v35 = vld [vmem:[%s0 + $0x48] sm:$0xff]
  %v36 = vld [vmem:[%s0 + $0x50] sm:$0xff]
  %v37 = vld [vmem:[%s0 + $0x58] sm:$0xff]
  %v38 = vld [vmem:[%s0 + $0x60] sm:$0xff]
  %v39 = vld [vmem:[%s0 + $0x68] sm:$0xff]
  %v40 = vld [vmem:[%s0 + $0x70] sm:$0xff]
  %v41 = vld [vmem:[%s0 + $0x78] sm:$0xff]
  %v42 = vld [vmem:[%s1] sm:$0xff]
  %v43 = vld [vmem:[%s1 + $0x8] sm:$0xff]
  %v44 = vld [vmem:[%s1 + $0x10] sm:$0xff]
  %v45 = vld [vmem:[%s1 + $0x18] sm:$0xff]
  %v46 = vld [vmem:[%s2] sm:$0xff]
  %v47 = vld [vmem:[%s2 + $0x8] sm:$0xff]
  %v48 = vld [vmem:[%s2 + $0x10] sm:$0xff]
  %v49 = vld [vmem:[%s2 + $0x18] sm:$0xff]
  %51 = vset.pattern.permute.xlu0 0
  %52 = vperm.xlu0 %51, %v46
  %v53 = vpop.permute.xlu0 %52
  %56 = vset.pattern.permute.xlu0 0
  %57 = vperm.xlu0 %56, %v47
  %v58 = vpop.permute.xlu0 %57
  %61 = vset.pattern.permute.xlu0 0
  %62 = vperm.xlu0 %61, %v48
  %v63 = vpop.permute.xlu0 %62
  %66 = vset.pattern.permute.xlu0 0
  %67 = vperm.xlu0 %66, %v49
  %v68 = vpop.permute.xlu0 %67
  %vm70 = vcmask 48128
  %v72 = vsel %vm70, %v42, 0
  %v75 = vsel %vm70, %v43, 0
  %v78 = vsel %vm70, %v44, 0
  %v81 = vsel %vm70, %v45, 0
  %v84 = vsel %vm70, %v26, 0
  %v87 = vsel %vm70, %v27, 0
  %v90 = vsel %vm70, %v28, 0
  %v93 = vsel %vm70, %v29, 0
  %v96 = vsel %vm70, %v30, 0
  %v99 = vsel %vm70, %v31, 0
  %v102 = vsel %vm70, %v32, 0
  %v105 = vsel %vm70, %v33, 0
  %v108 = vsel %vm70, %v34, 0
  %v111 = vsel %vm70, %v35, 0
  %v114 = vsel %vm70, %v36, 0
  %v117 = vsel %vm70, %v37, 0
  %v120 = vsel %vm70, %v38, 0
  %v123 = vsel %vm70, %v39, 0
  %v126 = vsel %vm70, %v40, 0
  %v129 = vsel %vm70, %v41, 0
  %131 = vmatpush.xpose.msra.mxu0 %v129
  %132 = vmatpush.xpose.msra.mxu0 %v126
  %133 = vmatpush.xpose.msra.mxu0 %v123
  %134 = vmatpush.xpose.msra.mxu0 %v120
  %135 = vmatpush.xpose.msra.mxu0 %v117
  %136 = vmatpush.xpose.msra.mxu0 %v114
  %137 = vmatpush.xpose.msra.mxu0 %v111
  %138 = vmatpush.xpose.msra.mxu0 %v108
  %139 = vmatpush.xpose.msra.mxu0 %v105
  %140 = vmatpush.xpose.msra.mxu0 %v102
  %141 = vmatpush.xpose.msra.mxu0 %v99
  %142 = vmatpush.xpose.msra.mxu0 %v96
  %143 = vmatpush.xpose.msra.mxu0 %v93
  %144 = vmatpush.xpose.msra.mxu0 %v90
  %145 = vmatpush.xpose.msra.mxu0 %v87
  %146 = vmatpush.xpose.msra.mxu0 %v84
  %147 = vmatmul.f32.gmra.mxu0 %v72
  %v148 = vpop.f32.mrf.mxu0
  %v149 = vadd.f32 %v53, %v148
  %150 = vmatmul.f32.gmra.mxu0 %v75
  %v151 = vpop.f32.mrf.mxu0
  %v152 = vadd.f32 %v58, %v151
  %153 = vmatmul.f32.gmra.mxu0 %v78
  %v154 = vpop.f32.mrf.mxu0
  %v155 = vadd.f32 %v63, %v154
  %156 = vmatmul.f32.gmra.mxu0 %v81
  %v157 = vpop.f32.mrf.mxu0
  %v158 = vadd.f32 %v68, %v157
  %159 = vdwg.mxu0
  %v160 = vmax.f32 %v149, 0.0
  %v161 = vmax.f32 %v152, 0.0
  %v162 = vmax.f32 %v155, 0.0
  %v163 = vmax.f32 %v158, 0.0
  %v164 = vld [vmem:[%s3] sm:$0xff]
  %v165 = vld [vmem:[%s3 + $0x8] sm:$0xff]
  %v166 = vld [vmem:[%s3 + $0x10] sm:$0xff]
  %v167 = vld [vmem:[%s3 + $0x18] sm:$0xff]
  %v168 = vld [vmem:[%s4] sm:$0xff]
  %v169 = vld [vmem:[%s4 + $0x8] sm:$0xff]
  %v170 = vld [vmem:[%s4 + $0x10] sm:$0xff]
  %v171 = vld [vmem:[%s4 + $0x18] sm:$0xff]
  %173 = vset.pattern.permute.xlu0 0
  %174 = vperm.xlu0 %173, %v168
  %v175 = vpop.permute.xlu0 %174
  %178 = vset.pattern.permute.xlu0 0
  %179 = vperm.xlu0 %178, %v169
  %v180 = vpop.permute.xlu0 %179
  %183 = vset.pattern.permute.xlu0 0
  %184 = vperm.xlu0 %183, %v170
  %v185 = vpop.permute.xlu0 %184
  %188 = vset.pattern.permute.xlu0 0
  %189 = vperm.xlu0 %188, %v171
  %v190 = vpop.permute.xlu0 %189
  %vm192 = vcmask 261120
  %v194 = vsel %vm192, %v164, 0
  %v197 = vsel %vm192, %v165, 0
  %v200 = vsel %vm192, %v166, 0
  %v203 = vsel %vm192, %v167, 0
  %205 = vmatpush.msra.mxu0 0.0
  %206 = vmatpush.msra.mxu0 0.0
  %207 = vmatpush.msra.mxu0 0.0
  %208 = vmatpush.msra.mxu0 0.0
  %209 = vmatpush.msra.mxu0 0.0
  %210 = vmatpush.msra.mxu0 0.0
  %211 = vmatpush.msra.mxu0 0.0
  %212 = vmatpush.msra.mxu0 0.0
  %213 = vmatpush.msra.mxu0 0.0
  %214 = vmatpush.msra.mxu0 0.0
  %215 = vmatpush.msra.mxu0 0.0
  %216 = vmatpush.msra.mxu0 0.0
  %217 = vmatpush.msra.mxu0 %v163
  %218 = vmatpush.msra.mxu0 %v162
  %219 = vmatpush.msra.mxu0 %v161
  %220 = vmatpush.msra.mxu0 %v160
  %221 = vmatmul.f32.gmra.mxu0 %v194
  %v222 = vpop.f32.mrf.mxu0
  %v223 = vadd.f32 %v175, %v222
  %224 = vmatmul.f32.gmra.mxu0 %v197
  %v225 = vpop.f32.mrf.mxu0
  %v226 = vadd.f32 %v180, %v225
  %227 = vmatmul.f32.gmra.mxu0 %v200
  %v228 = vpop.f32.mrf.mxu0
  %v229 = vadd.f32 %v185, %v228
  %230 = vmatmul.f32.gmra.mxu0 %v203
  %v231 = vpop.f32.mrf.mxu0
  %v232 = vadd.f32 %v190, %v231
  %233 = vdwg.mxu0
  %v234 = vmax.f32 %v223, 0.0
  %v235 = vmax.f32 %v226, 0.0
  %v236 = vmax.f32 %v229, 0.0
  %v237 = vmax.f32 %v232, 0.0
  %v238 = vld [vmem:[%s5] sm:$0xff]
  %v239 = vld [vmem:[%s5 + $0x8] sm:$0xff]
  %v240 = vld [vmem:[%s5 + $0x10] sm:$0xff]
  %v241 = vld [vmem:[%s6] sm:$0xff]
  %v242 = vld [vmem:[%s6 + $0x8] sm:$0xff]
  %v243 = vld [vmem:[%s6 + $0x10] sm:$0xff]
  %245 = vset.pattern.permute.xlu0 0
  %246 = vperm.xlu0 %245, %v241
  %v247 = vpop.permute.xlu0 %246
  %250 = vset.pattern.permute.xlu0 0
  %251 = vperm.xlu0 %250, %v242
  %v252 = vpop.permute.xlu0 %251
  %255 = vset.pattern.permute.xlu0 0
  %256 = vperm.xlu0 %255, %v243
  %v257 = vpop.permute.xlu0 %256
  %v260 = vsel %vm192, %v238, 0
  %v263 = vsel %vm192, %v239, 0
  %v266 = vsel %vm192, %v240, 0
  %268 = vmatpush.msra.mxu0 0.0
  %269 = vmatpush.msra.mxu0 0.0
  %270 = vmatpush.msra.mxu0 0.0
  %271 = vmatpush.msra.mxu0 0.0
  %272 = vmatpush.msra.mxu0 0.0
  %273 = vmatpush.msra.mxu0 0.0
  %274 = vmatpush.msra.mxu0 0.0
  %275 = vmatpush.msra.mxu0 0.0
  %276 = vmatpush.msra.mxu0 0.0
  %277 = vmatpush.msra.mxu0 0.0
  %278 = vmatpush.msra.mxu0 0.0
  %279 = vmatpush.msra.mxu0 0.0
  %280 = vmatpush.msra.mxu0 %v237
  %281 = vmatpush.msra.mxu0 %v236
  %282 = vmatpush.msra.mxu0 %v235
  %283 = vmatpush.msra.mxu0 %v234
  %284 = vmatmul.f32.gmra.mxu0 %v260
  %v285 = vpop.f32.mrf.mxu0
  %v286 = vadd.f32 %v247, %v285
  %287 = vmatmul.f32.gmra.mxu0 %v263
  %v288 = vpop.f32.mrf.mxu0
  %v289 = vadd.f32 %v252, %v288
  %290 = vmatmul.f32.gmra.mxu0 %v266
  %v291 = vpop.f32.mrf.mxu0
  %v292 = vadd.f32 %v257, %v291
  %293 = vdwg.mxu0
  %294 = vst [vmem:[%s7] sm:$0xff] %v286
  %295 = vst [vmem:[%s7 + $0x8] sm:$0xff] %v289
  %296 = vst [vmem:[%s7 + $0x10] sm:$0xff] %v292
  // Predicated region
  $region30: #{mlp_forward.1} parent=0 // pred_check
    _
  $region31: #{mlp_forward.1} parent=0 // pred_check_branch
    %298 = sbr.rel (0) target = $region33
  $region32: #{mlp_forward.1} parent=0 // pred_region
    _
  $region33: #{mlp_forward.1} parent=0 // pred_fallthru
    _
  // Predicated region
  $region34: #{mlp_forward.1} parent=0 // pred_check
    _
  $region35: #{mlp_forward.1} parent=0 // pred_check_branch
    %300 = sbr.rel (0) target = $region37
  $region36: #{mlp_forward.1} parent=0 // pred_region
    _
  $region37: #{mlp_forward.1} parent=0 // pred_fallthru
    _

</llo_original>
